<compile_context>
chip_gen: v7x
topology: tpu7x:2x2x1
jax: 0.10.0
libtpu: 0.0.40
codegen_flags: <defaults>
</compile_context>

<pallas_src>
import jax
import jax.numpy as jnp
from jax.experimental import pallas as pl
from jax.experimental.pallas import tpu as pltpu


def _round_up(n, m):
    return ((n + m - 1) // m) * m


def _choose_tile_b(B, D, itemsize):
    """Rows of x per grid step: target ~2 MiB per tile, multiple of 8 rows."""
    target_bytes = 2 << 20
    tile = target_bytes // max(D * itemsize, 1)
    tile = max(8, min(tile, 8192))
    if B >= 1024:
        # Keep >= 2 grid steps so the "parallel" batch axis can shard across
        # both TensorCores on v7x (no effect on single-TC v5e/v6e).
        tile = min(tile, pl.cdiv(B, 2))
    tile = min(tile, _round_up(B, 8))
    tile = max(8, (tile // 8) * 8)
    return tile


def wide_kernel(x_ref, w_ref, b_ref, o_ref):
    # x_ref: (tile_b, D) f32 batch tile; w_ref: (1, D) resident weight row;
    # b_ref: (1, 1) resident bias.  GEMV = VPU broadcast-mul + lane reduce,
    # exact f32; result stored as a narrow (tile_b, 1) column (no padded slab).
    y = jnp.sum(x_ref[...] * w_ref[...], axis=-1, keepdims=True)
    o_ref[...] = y + b_ref[...]


def wide_forward(x, w, b):
    """Wide forward: y = x @ w + b.

    x: (B, D) float32
    w: (D, 1) float32 (nn.Linear weight, stored transposed)
    b: (1,)  float32 (nn.Linear bias)
    returns: (B, 1) float32
    """
    B, D = x.shape
    assert w.shape == (D, 1) and b.shape == (1,)

    x = x.astype(jnp.float32)
    w_row = w.reshape(1, D).astype(jnp.float32)   # reshape only; no copy pass over x
    b_2d = b.reshape(1, 1).astype(jnp.float32)

    tile_b = _choose_tile_b(B, D, x.dtype.itemsize)
    grid = (pl.cdiv(B, tile_b),)

    # VMEM budget: double-buffered x tiles + resident weight/bias + output
    # blocks + slack; capped below v7x's 64 MiB per-core VMEM.
    x_tile_bytes = tile_b * D * x.dtype.itemsize
    vmem_limit = 2 * x_tile_bytes + 2 * (D * 4 + 4 + tile_b * 4) + (4 << 20)
    vmem_limit = int(min(max(vmem_limit, 16 << 20), 56 << 20))

    # TODO(synk): for extremely large D (a single x tile > ~28 MiB even at 8
    # rows) add a K grid axis over D with an f32 accumulator scratch.

    flops = 2 * B * D
    bytes_accessed = x.size * x.dtype.itemsize + D * 4 + 4 + B * 4

    return pl.pallas_call(
        wide_kernel,
        out_shape=jax.ShapeDtypeStruct((B, 1), jnp.float32),
        grid=grid,
        in_specs=[
            pl.BlockSpec((tile_b, D), lambda i: (i, 0)),  # x: batch-tiled
            pl.BlockSpec((1, D), lambda i: (0, 0)),       # w: resident row
            pl.BlockSpec((1, 1), lambda i: (0, 0)),       # b: resident scalar
        ],
        out_specs=pl.BlockSpec((tile_b, 1), lambda i: (i, 0)),
        compiler_params=pltpu.CompilerParams(
            dimension_semantics=("parallel",),
            vmem_limit_bytes=vmem_limit),
        cost_estimate=pl.CostEstimate(
            flops=flops, transcendentals=0, bytes_accessed=bytes_accessed),
    )(x, w_row, b_2d)


def init_params(key, input_dim):
    """Deterministic init mirroring nn.Linear(input_dim, 1) (W transposed)."""
    kw, kb = jax.random.split(key)
    bound = 1.0 / (input_dim ** 0.5)  # PyTorch default uniform bound
    w = jax.random.uniform(kw, (input_dim, 1), jnp.float32, -bound, bound)
    b = jax.random.uniform(kb, (1,), jnp.float32, -bound, bound)
    return w, b


def reference_forward(x, w, b):
    return x @ w + b


if __name__ == "__main__":
    key = jax.random.PRNGKey(0)
    batch, input_dim = 8, 32

    kx, kp = jax.random.split(key)
    x = jax.random.normal(kx, (batch, input_dim), jnp.float32)
    w, b = init_params(kp, input_dim)

    out = jax.block_until_ready(wide_forward(x, w, b))
    ref = reference_forward(x, w, b)

    assert out.shape == (batch, 1), out.shape
    # Exact f32 path (VPU multiply + lane reduce) -> tight tolerance vs f32 ref.
    assert jnp.allclose(out, ref, atol=1e-4, rtol=1e-4), "mismatch vs reference"

    print("KERNEL_OK")
</pallas_src>

<mosaic_0001>
module attributes {stable_mosaic.version = 11 : i64} {
  func.func @wide_kernel(%arg0: i32, %arg1: memref<8x32xf32, #tpu.memory_space<vmem>>, %arg2: memref<1x32xf32, #tpu.memory_space<vmem>>, %arg3: memref<1x1xf32, #tpu.memory_space<vmem>>, %arg4: memref<8x1xf32, #tpu.memory_space<vmem>>) attributes {dimension_semantics = [#tpu.dimension_semantics<parallel>], iteration_bounds = array<i64: 1>, scalar_prefetch = 0 : i64, scratch_operands = 0 : i64, tpu.core_type = #tpu.core_type<tc>, window_params = [{transform_indices = @transform_0, window_bounds = array<i64: 8, 32>}, {pipeline_mode = #tpu.pipeline_mode<synchronous>, transform_indices = @transform_1, window_bounds = array<i64: 1, 32>}, {pipeline_mode = #tpu.pipeline_mode<synchronous>, transform_indices = @transform_2, window_bounds = array<i64: 1, 1>}, {transform_indices = @transform_3, window_bounds = array<i64: 8, 1>}]} {
    %c0 = arith.constant 0 : index
    %c0_0 = arith.constant 0 : index
    %0 = vector.load %arg1[%c0, %c0_0] : memref<8x32xf32, #tpu.memory_space<vmem>>, vector<8x32xf32>
    %c0_1 = arith.constant 0 : index
    %c0_2 = arith.constant 0 : index
    %1 = vector.load %arg2[%c0_1, %c0_2] : memref<1x32xf32, #tpu.memory_space<vmem>>, vector<1x32xf32>
    %2 = vector.broadcast %1 : vector<1x32xf32> to vector<8x32xf32>
    %3 = arith.mulf %0, %2 : vector<8x32xf32>
    %cst = arith.constant dense<0.000000e+00> : vector<8xf32>
    %4 = vector.multi_reduction <add>, %3, %cst [1] : vector<8x32xf32> to vector<8xf32>
    %5 = vector.shape_cast %4 : vector<8xf32> to vector<8x1xf32>
    %c0_3 = arith.constant 0 : index
    %c0_4 = arith.constant 0 : index
    %6 = vector.load %arg3[%c0_3, %c0_4] : memref<1x1xf32, #tpu.memory_space<vmem>>, vector<1x1xf32>
    %7 = vector.broadcast %6 : vector<1x1xf32> to vector<8x1xf32>
    %8 = arith.addf %5, %7 : vector<8x1xf32>
    %c0_5 = arith.constant 0 : index
    %c0_6 = arith.constant 0 : index
    %9 = vector.load %arg4[%c0_5, %c0_6] : memref<8x1xf32, #tpu.memory_space<vmem>>, vector<8x1xf32>
    tpu.vector_store %arg4[%c0_5, %c0_6], %8 {strides = array<i32>} : memref<8x1xf32, #tpu.memory_space<vmem>>, vector<8x1xf32>,
    return
  }
  func.func @transform_0(%arg0: i32) -> (i32, i32) {
    %c0_i32 = arith.constant 0 : i32
    %c0_i32_0 = arith.constant 0 : i32
    return %arg0, %c0_i32 : i32, i32
  }
  func.func @transform_1(%arg0: i32) -> (i32, i32) {
    %c0_i32 = arith.constant 0 : i32
    %c0_i32_0 = arith.constant 0 : i32
    %c0_i32_1 = arith.constant 0 : i32
    return %c0_i32, %c0_i32_0 : i32, i32
  }
  func.func @transform_2(%arg0: i32) -> (i32, i32) {
    %c0_i32 = arith.constant 0 : i32
    %c0_i32_0 = arith.constant 0 : i32
    %c0_i32_1 = arith.constant 0 : i32
    return %c0_i32, %c0_i32_0 : i32, i32
  }
  func.func @transform_3(%arg0: i32) -> (i32, i32) {
    %c0_i32 = arith.constant 0 : i32
    %c0_i32_0 = arith.constant 0 : i32
    return %arg0, %c0_i32 : i32, i32
  }
}

</mosaic_0001>

<llo_original>
// kernel: tpu_custom_call.1
$region0: #{tpu_custom_call.1}
  #allocation0 [shape = 'u32[]', space=smem, size = 0x4, offset = 0x4, fixed_abs, tag = 'smem constant byte address 0x4 - core index']
  #allocation1 [shape = 'u32[144,128]{1,0:T(1,128)}', space=vmem, size = 0x12000, scoped, tag = 'internal scratch']
  #allocation2 [shape = 'f32[1,1]{1,0:T(1,128)S(1)}', space=vmem, size = 0x200, scoped, tag = 'scoped memory for tpu_custom_call.1']
  %s0 = inlined_call_operand.hbm [shape: f32[8,32], index: 0, kind: input, shape index: {}]
  %s1 = inlined_call_operand.vmem [shape: f32[1,32], index: 1, kind: input, shape index: {}]
  %s2 = inlined_call_operand.<no memory space> [shape: f32[1,1], index: 2, kind: input, shape index: {}]
  %s3 = inlined_call_operand.vmem [shape: f32[8,1], index: 3, kind: output, shape index: {}]
  %s4 = sld [smem:[#allocation0]]
  $region26: #{tpu_custom_call.1} parent=0
    _
  %s6 = ssub.s32 1, %s4
  %s7 = scalar_select 0, %s6, %s4
  %v8 = vstv %s2
  %9 = vst [vmem:[#allocation2] sm:$0x1] %v8
  $region1: #{tpu_custom_call.1} parent=0
    #allocation3 [shape = 'u8[4096]{0}', space=vmem, size = 0x1000, scoped, tag = 'input window, operand 0, single buffered']
    #allocation4 [shape = 's32[1]{0}', space=sflag, size = 0x4, scoped, tag = 'scoped memory for tpu_custom_call.1']
    %10 = vsyncpa [#allocation4], 0
    // Predicated region
    $region2: #{tpu_custom_call.1} parent=1 // pred_check
      _
    $region3: #{tpu_custom_call.1} parent=1 // pred_check_branch
      %12 = sbr.rel (0) target = $region5
    $region4: #{tpu_custom_call.1} parent=1 // pred_region
      %s14 = ssub.s32 128, 128
      %15 = vsyncadd [#allocation4], %s14
      %s17 = sshll.u32 [#allocation3], 4
      %s18 = int_to_ptr.vmem [resolvable:$true] %s17
      %20 = dma.hbm_to_vmem [thread:$0]  %s0, 128, %s18, [#allocation4]
    $region5: #{tpu_custom_call.1} parent=1 // pred_fallthru
      _
    // Predicated region
    $region6: #{tpu_custom_call.1} parent=1 // pred_check
      _
    $region7: #{tpu_custom_call.1} parent=1 // pred_check_branch
      %22 = sbr.rel (0) target = $region9
    $region8: #{tpu_custom_call.1} parent=1 // pred_region
      _
    $region9: #{tpu_custom_call.1} parent=1 // pred_fallthru
      _
    // Predicated region
    $region10: #{tpu_custom_call.1} parent=1 // pred_check
      _
    $region11: #{tpu_custom_call.1} parent=1 // pred_check_branch
      %24 = sbr.rel (0) target = $region13
    $region12: #{tpu_custom_call.1} parent=1 // pred_region
      _
    $region13: #{tpu_custom_call.1} parent=1 // pred_fallthru
      _
    // Predicated region
    $region14: #{tpu_custom_call.1} parent=1 // pred_check
      _
    $region15: #{tpu_custom_call.1} parent=1 // pred_check_branch
      %26 = sbr.rel (0) target = $region17
    $region16: #{tpu_custom_call.1} parent=1 // pred_region
      %27 = dma.done [#allocation4], 128
    $region17: #{tpu_custom_call.1} parent=1 // pred_fallthru
      _
    %v28 = vld [vmem:[#allocation3] sm:$0xff]
    %v29 = vld [vmem:[%s1] sm:$0x1]
    %v31 = vlaneseq
    %v32 = vshrl.u32 %v31, 7
    %v33 = vsub.s32 0, %v32
    %v34 = vrot.slane %v29, %v33
    %v36 = vmul.f32 %v28, %v34
    %vm37 = vcmask 261120
    %v38 = vsel %vm37, %v36, 0.0
    %39 = vadd.xlane.f32.xlu0 %v38
    %v40 = vpop.xlane.xlu0 %39
    %v41 = vld [vmem:[#allocation2] sm:$0x1]
    %v43 = vlaneseq
    %v44 = vshrl.u32 %v43, 7
    %v45 = vsub.s32 0, %v44
    %v46 = vrot.slane %v41, %v45
    %v48 = vadd.f32 %v40, %v46
    %vm49 = vcmask 7168
    %50 = vst.msk [vmem:[%s3] sm:$0xff] %vm49, %v48
    // Predicated region
    $region18: #{tpu_custom_call.1} parent=1 // pred_check
      _
    $region19: #{tpu_custom_call.1} parent=1 // pred_check_branch
      %52 = sbr.rel (0) target = $region21
    $region20: #{tpu_custom_call.1} parent=1 // pred_region
      _
    $region21: #{tpu_custom_call.1} parent=1 // pred_fallthru
      _
    // Predicated region
    $region22: #{tpu_custom_call.1} parent=1 // pred_check
      _
    $region23: #{tpu_custom_call.1} parent=1 // pred_check_branch
      %54 = sbr.rel (0) target = $region25
    $region24: #{tpu_custom_call.1} parent=1 // pred_region
      _
    $region25: #{tpu_custom_call.1} parent=1 // pred_fallthru
      _
    %55 = vsyncpa [#allocation4], 1

</llo_original>
